<compile_context>
chip_gen: v7x
topology: tpu7x:2x2x1
jax: 0.10.0
libtpu: 0.0.40
codegen_flags: <defaults>
</compile_context>

<pallas_src>
import math

import jax
import jax.numpy as jnp
from jax.experimental import pallas as pl
from jax.experimental.pallas import tpu as pltpu


_LANE = 128
_MAX_LANE_WIDTH = 8192                    # widest lane dimension we consider
_TARGET_BLOCK_BYTES = 4 * 1024 * 1024     # ~4 MiB per block (x4 live buffers = 16 MiB)
_VMEM_LIMIT_BYTES = 32 * 1024 * 1024      # safe on v5e/v6e (128 MiB) and v7x (64 MiB/TC)
_ROWVEC_BLOCK_ELEMS = 32 * 1024           # lane-block for the unaligned (1, numel) path


def _copy_kernel(x_ref, o_ref):
    # identity copy of one tile
    o_ref[...] = x_ref[...]


def _resolve_shape(numel, shape):
    """Resolve a torch-style view shape (supports a single -1)."""
    shape = list(shape)
    if shape.count(-1) > 1:
        raise ValueError("only one dimension can be inferred")
    if -1 in shape:
        known = 1
        for s in shape:
            if s != -1:
                known *= s
        shape[shape.index(-1)] = numel // known
    if math.prod(shape) != numel:
        raise ValueError(f"cannot view {numel} elements as {tuple(shape)}")
    return tuple(shape)


def _pick_lane_width(numel):
    """Widest multiple of 128 (<= _MAX_LANE_WIDTH) that divides numel."""
    for k in range(_MAX_LANE_WIDTH // _LANE, 0, -1):
        c = _LANE * k
        if numel % c == 0:
            return c
    return None


def _sublane_quantum(dtype):
    """Sublane packing quantum: 8 for f32, 16 for bf16, 32 for int8/fp8."""
    itemsize = jnp.dtype(dtype).itemsize
    return max(8, 32 // max(1, itemsize))


def _pick_tile_rows(rows, c, dtype):
    """Largest divisor of rows <= ~4 MiB worth of rows that is a multiple of the
    sublane quantum (no masked partial block); fall back to a rounded tile with
    a masked last block only if no such divisor exists."""
    itemsize = jnp.dtype(dtype).itemsize
    target = max(1, _TARGET_BLOCK_BYTES // (c * itemsize))
    if rows <= target:
        return rows                       # full sublane extent -> always legal
    q = _sublane_quantum(dtype)
    d = (target // q) * q
    while d >= q:
        if rows % d == 0:
            return d                      # exact divisor -> no partial block
        d -= q
    return max(q, (target // q) * q)      # masked partial last block fallback


def _preferred_dim_semantics():
    """CORE_PARALLEL on multi-TensorCore chips (v7x), plain 'parallel' otherwise."""
    try:
        kind = jax.devices()[0].device_kind.lower()
    except Exception:
        return ("parallel",)
    if "v7" in kind or "7x" in kind:
        return (pltpu.CORE_PARALLEL,)
    return ("parallel",)


def _copy_2d(x2d, donate=False):
    """Pallas identity copy of a (rows, C) array with large lane-dense blocks."""
    rows, c = x2d.shape
    tile_rows = _pick_tile_rows(rows, c, x2d.dtype)
    grid = (pl.cdiv(rows, tile_rows),)

    def build(dim_sems):
        return pl.pallas_call(
            _copy_kernel,
            out_shape=jax.ShapeDtypeStruct((rows, c), x2d.dtype),
            grid_spec=pltpu.PrefetchScalarGridSpec(
                num_scalar_prefetch=0,
                grid=grid,
                in_specs=[pl.BlockSpec((tile_rows, c), lambda i: (i, 0))],
                out_specs=pl.BlockSpec((tile_rows, c), lambda i: (i, 0)),
            ),
            compiler_params=pltpu.CompilerParams(
                dimension_semantics=dim_sems,
                vmem_limit_bytes=_VMEM_LIMIT_BYTES,
            ),
            input_output_aliases=({0: 0} if donate else {}),
        )

    sems = _preferred_dim_semantics()
    try:
        return build(sems)(x2d)
    except Exception:
        if sems == ("parallel",):
            raise
        # Defensive fallback if CORE_PARALLEL is not accepted on this part.
        return build(("parallel",))(x2d)


def _copy_unaligned(flat):
    """Copy a flat array whose length is not a multiple of 128.

    The array is viewed as a (1, numel) row vector and tiled along lanes; the
    final edge block is clamped by Pallas, so there is no pad / trailing slice
    and the tensor is read + written exactly once."""
    numel = flat.shape[0]
    x2d = flat.reshape(1, numel)
    if numel <= _ROWVEC_BLOCK_ELEMS:
        block = (1, numel)                # block == full array dims -> legal
        grid = (1,)
    else:
        block = (1, _ROWVEC_BLOCK_ELEMS)  # multiple of 128; last block clamped
        grid = (pl.cdiv(numel, _ROWVEC_BLOCK_ELEMS),)
    out = pl.pallas_call(
        _copy_kernel,
        out_shape=jax.ShapeDtypeStruct((1, numel), flat.dtype),
        grid_spec=pltpu.PrefetchScalarGridSpec(
            num_scalar_prefetch=0,
            grid=grid,
            in_specs=[pl.BlockSpec(block, lambda i: (0, i))],
            out_specs=pl.BlockSpec(block, lambda i: (0, i)),
        ),
        compiler_params=pltpu.CompilerParams(
            dimension_semantics=("arbitrary",),
            vmem_limit_bytes=_VMEM_LIMIT_BYTES,
        ),
    )(x2d)
    return out.reshape(numel)


def view_pallas(x, *shape, materialize=False, donate=False):
    """torch View(*shape) equivalent.

    Default (materialize=False): metadata-only jnp.reshape (zero HBM traffic).
    materialize=True: explicit Pallas identity-copy into a fresh buffer.
    donate=True: reuse the flattened input buffer for the output (aligned path).
    """
    numel = x.size
    out_shape = _resolve_shape(numel, shape)
    if not materialize or numel == 0:
        # A view is pure layout metadata — this is the fast path.
        return jnp.reshape(x, out_shape)

    flat = jnp.ravel(x)  # zero-cost metadata for a contiguous array

    if numel % _LANE == 0:
        # Lane-aligned: one HBM read + one write with big contiguous blocks.
        c = _pick_lane_width(numel)
        rows = numel // c
        out2d = _copy_2d(flat.reshape(rows, c), donate=donate)
        return out2d.reshape(out_shape)

    # Unaligned numel: lane-tiled (1, numel) copy with a clamped final block.
    return _copy_unaligned(flat).reshape(out_shape)


class View:
    """JAX/Pallas equivalent of the PyTorch View helper module (no params)."""

    def __init__(self, *shape, materialize=False):
        self.shape = shape
        self.materialize = materialize

    def __call__(self, x):
        return view_pallas(x, *self.shape, materialize=self.materialize)


if __name__ == "__main__":
    keys = jax.random.split(jax.random.PRNGKey(0), 8)

    # 0) Default View: metadata-only reshape (the common, zero-cost path).
    x = jax.random.normal(keys[0], (2, 4, 16, 16), dtype=jnp.float32)
    y = jax.block_until_ready(View(2, 4, -1)(x))
    assert y.shape == (2, 4, 256) and y.dtype == x.dtype
    assert bool(jnp.all(y == jnp.reshape(x, (2, 4, 256))))

    # 1) Materialized Pallas copy, lane-aligned single-block path.
    ym = jax.block_until_ready(View(2, 4, -1, materialize=True)(x))
    assert ym.shape == (2, 4, 256) and ym.dtype == x.dtype
    assert bool(jnp.all(ym == jnp.reshape(x, (2, 4, 256))))

    # 2) Multi-step grid with an exact-divisor tile (no masked partial block).
    x2 = jax.random.normal(keys[1], (1024, 1280), dtype=jnp.float32)
    y2 = jax.block_until_ready(View(-1, 320, materialize=True)(x2))
    assert y2.shape == (4096, 320)
    assert bool(jnp.all(y2 == jnp.reshape(x2, (4096, 320))))

    # 3) Masked partial last row-block fallback (prime row count).
    x3 = jax.random.normal(keys[2], (131, 8192), dtype=jnp.float32)
    y3 = jax.block_until_ready(View(131 * 64, 128, materialize=True)(x3))
    assert bool(jnp.all(y3 == jnp.reshape(x3, (131 * 64, 128))))

    # 4) Unaligned numel, single full block (no pad / slice round-trips).
    x4 = jax.random.normal(keys[3], (3, 5, 7), dtype=jnp.float32)
    y4 = jax.block_until_ready(View(-1, materialize=True)(x4))
    assert bool(jnp.all(y4 == jnp.reshape(x4, (-1,))))

    # 5) Unaligned numel, multi-block lane-tiled path with clamped edge block.
    x5 = jax.random.normal(keys[4], (300, 301), dtype=jnp.float32)
    y5 = jax.block_until_ready(View(301, 300, materialize=True)(x5))
    assert bool(jnp.all(y5 == jnp.reshape(x5, (301, 300))))

    # 6) Sub-32-bit dtype (bf16) path.
    x6 = jax.random.normal(keys[5], (2, 8, 128), dtype=jnp.bfloat16)
    y6 = jax.block_until_ready(View(16, 128, materialize=True)(x6))
    assert bool(jnp.all(y6 == jnp.reshape(x6, (16, 128))))

    # 7) Donated materialized copy (input_output_aliases={0: 0}).
    x7 = jax.random.normal(keys[6], (64, 256), dtype=jnp.float32)
    ref7 = jnp.reshape(x7, (128, 128))
    y7 = jax.block_until_ready(
        view_pallas(x7, 128, 128, materialize=True, donate=True))
    assert bool(jnp.all(y7 == ref7))

    print("KERNEL_OK")
</pallas_src>

<mosaic_0001>
module attributes {stable_mosaic.version = 11 : i64} {
  func.func @_copy_kernel(%arg0: i32, %arg1: memref<1x2048xf32, #tpu.memory_space<vmem>>, %arg2: memref<1x2048xf32, #tpu.memory_space<vmem>>) attributes {dimension_semantics = [#tpu.dimension_semantics<parallel>], iteration_bounds = array<i64: 1>, scalar_prefetch = 0 : i64, scratch_operands = 0 : i64, tpu.core_type = #tpu.core_type<tc>, window_params = [{transform_indices = @transform_0, window_bounds = array<i64: 1, 2048>}, {transform_indices = @transform_1, window_bounds = array<i64: 1, 2048>}]} {
    %c0 = arith.constant 0 : index
    %c0_0 = arith.constant 0 : index
    %0 = vector.load %arg1[%c0, %c0_0] : memref<1x2048xf32, #tpu.memory_space<vmem>>, vector<1x2048xf32>
    %c0_1 = arith.constant 0 : index
    %c0_2 = arith.constant 0 : index
    %1 = vector.load %arg2[%c0_1, %c0_2] : memref<1x2048xf32, #tpu.memory_space<vmem>>, vector<1x2048xf32>
    tpu.vector_store %arg2[%c0_1, %c0_2], %0 {strides = array<i32>} : memref<1x2048xf32, #tpu.memory_space<vmem>>, vector<1x2048xf32>,
    return
  }
  func.func @transform_0(%arg0: i32) -> (i32, i32) {
    %c0_i32 = arith.constant 0 : i32
    %c0_i32_0 = arith.constant 0 : i32
    return %arg0, %c0_i32 : i32, i32
  }
  func.func @transform_1(%arg0: i32) -> (i32, i32) {
    %c0_i32 = arith.constant 0 : i32
    %c0_i32_0 = arith.constant 0 : i32
    return %arg0, %c0_i32 : i32, i32
  }
}

</mosaic_0001>

<llo_original>
// kernel: tpu_custom_call.1
$region0: #{tpu_custom_call.1}
  #allocation0 [shape = 'u32[]', space=smem, size = 0x4, offset = 0x4, fixed_abs, tag = 'smem constant byte address 0x4 - core index']
  #allocation1 [shape = 'u32[144,128]{1,0:T(1,128)}', space=vmem, size = 0x12000, scoped, tag = 'internal scratch']
  %s0 = inlined_call_operand.hbm [shape: f32[1,2048], index: 0, kind: input, shape index: {}]
  %s1 = inlined_call_operand.hbm [shape: f32[1,2048], index: 1, kind: output, shape index: {}]
  %s2 = sld [smem:[#allocation0]]
  $region18: #{tpu_custom_call.1} parent=0
    _
  %s4 = ssub.s32 1, %s2
  %s5 = scalar_select 0, %s4, %s2
  $region1: #{tpu_custom_call.1} parent=0
    #allocation2 [shape = 'u8[8192]{0}', space=vmem, size = 0x2000, scoped, tag = 'input window, operand 0, single buffered']
    #allocation3 [shape = 's32[1]{0}', space=sflag, size = 0x4, scoped, tag = 'scoped memory for tpu_custom_call.1']
    #allocation4 [shape = 's32[1]{0}', space=sflag, size = 0x4, scoped, tag = 'scoped memory for tpu_custom_call.1']
    #allocation5 [shape = 'u8[8192]{0}', space=vmem, size = 0x2000, scoped, tag = 'output window, operand 0, single buffered']
    %6 = vsyncpa [#allocation3], 0
    %7 = vsyncpa [#allocation4], 0
    // Predicated region
    $region2: #{tpu_custom_call.1} parent=1 // pred_check
      _
    $region3: #{tpu_custom_call.1} parent=1 // pred_check_branch
      %9 = sbr.rel (0) target = $region5
    $region4: #{tpu_custom_call.1} parent=1 // pred_region
      %s11 = ssub.s32 256, 256
      %12 = vsyncadd [#allocation3], %s11
      %s14 = sshll.u32 [#allocation2], 4
      %s15 = int_to_ptr.vmem [resolvable:$true] %s14
      %17 = dma.hbm_to_vmem [thread:$0]  %s0, 256, %s15, [#allocation3]
    $region5: #{tpu_custom_call.1} parent=1 // pred_fallthru
      _
    // Predicated region
    $region6: #{tpu_custom_call.1} parent=1 // pred_check
      _
    $region7: #{tpu_custom_call.1} parent=1 // pred_check_branch
      %19 = sbr.rel (0) target = $region9
    $region8: #{tpu_custom_call.1} parent=1 // pred_region
      %20 = dma.done [#allocation3], 256
    $region9: #{tpu_custom_call.1} parent=1 // pred_fallthru
      _
    %v21 = vld [vmem:[#allocation2] sm:$0xff]
    %v22 = vld [vmem:[#allocation2 + $0x8] sm:$0xff]
    %23 = vst [vmem:[#allocation5] sm:$0xff] %v21
    %24 = vst [vmem:[#allocation5 + $0x8] sm:$0xff] %v22
    // Predicated region
    $region10: #{tpu_custom_call.1} parent=1 // pred_check
      _
    $region11: #{tpu_custom_call.1} parent=1 // pred_check_branch
      %26 = sbr.rel (0) target = $region13
    $region12: #{tpu_custom_call.1} parent=1 // pred_region
      %s28 = ssub.s32 256, 256
      %29 = vsyncadd [#allocation4], %s28
      %s31 = sshll.u32 [#allocation5], 4
      %s32 = int_to_ptr.vmem [resolvable:$true] %s31
      %34 = dma.vmem_to_hbm [thread:$0]  %s32, 256, %s1, [#allocation4]
    $region13: #{tpu_custom_call.1} parent=1 // pred_fallthru
      _
    // Predicated region
    $region14: #{tpu_custom_call.1} parent=1 // pred_check
      _
    $region15: #{tpu_custom_call.1} parent=1 // pred_check_branch
      %36 = sbr.rel (0) target = $region17
    $region16: #{tpu_custom_call.1} parent=1 // pred_region
      %37 = dma.done [#allocation4], 256
    $region17: #{tpu_custom_call.1} parent=1 // pred_fallthru
      _
    %38 = vsyncpa [#allocation3], 1
    %39 = vsyncpa [#allocation4], 1

</llo_original>
